<compile_context>
chip_gen: v5e
topology: v5e:2x2
jax: 0.10.0
libtpu: 0.0.40
codegen_flags: <defaults>
</compile_context>

<pallas_src>
import jax
import jax.numpy as jnp
from jax import lax
from jax.experimental import pallas as pl
from jax.experimental.pallas import tpu as pltpu


def _round_up(x, m):
    return ((x + m - 1) // m) * m


def _pick_vmem_limit_bytes():
    """~80% of per-core VMEM (v5e/v6e: 128 MiB, v7x: 64 MiB); safe fallback."""
    try:
        info = pltpu.get_tpu_info()
        for attr in ("vmem_capacity_bytes", "vmem_bytes", "vmem_size_bytes"):
            cap = getattr(info, attr, None)
            if cap:
                return int(cap * 0.8)
    except Exception:
        pass
    return 64 * 1024 * 1024


def _choose_time_tile(L, C_in, C_out, x_bytes, cd_bytes, tl_target,
                      vmem_limit_bytes):
    """Largest multiple-of-128 time tile <= tl_target that roughly fits VMEM."""
    if L <= 128:
        return L
    # crude steady-state VMEM bytes per time step (lane):
    #   double-buffered x-in / out blocks, compute-dtype shifted views /
    #   x_ext / h_ext, and f32 conv results + residual + epilogue temps.
    per_t = (2 * (C_in + C_out) * x_bytes
             + 3 * (C_in + C_out) * cd_bytes
             + 4 * C_out * 4)
    budget = vmem_limit_bytes // 2      # leave room for weights/carries/temps
    tl_cap = max(128, (budget // max(per_t, 1)) // 128 * 128)
    tl = max(128, (min(tl_target, tl_cap) // 128) * 128)
    return min(tl, L)


def _make_temporal_block_kernel(*, C_in, C_out, TL, K, d, p, pw, fuse_im2col,
                                has_downsample, use_carry, cd):
    """Kernel body for one (batch element, time tile) grid step."""

    def causal_views(ext, tile):
        # K causal views over [history | tile]; tap K-1 is exactly `tile`
        # (128-aligned, no lane rotate).  Offsets use the right-aligned,
        # 128-padded history width pw.
        views = [ext[:, (pw - p) + k * d:(pw - p) + k * d + TL]
                 for k in range(K - 1)]
        views.append(tile)
        return views

    def body(*refs):
        refs = list(refs)
        x_ref, w1_ref, b1_ref, w2_ref, b2_ref = refs[:5]
        refs = refs[5:]
        if (not fuse_im2col) and has_downsample:
            wd_ref, bd_ref = refs[:2]
            refs = refs[2:]
        o_ref = refs[0]
        refs = refs[1:]
        if use_carry:
            xc_ref, hc_ref = refs[:2]

        l = pl.program_id(1)
        x_in = x_ref[0]                                    # (C_in, TL)
        x_tile = x_in.astype(cd)

        # ---- causal left history (zeros at t < 0, carried VMEM otherwise) --
        if p > 0:
            if use_carry:
                @pl.when(l == 0)
                def _init_carry():
                    xc_ref[...] = jnp.zeros((C_in, pw), cd)
                    hc_ref[...] = jnp.zeros((C_out, pw), cd)
                x_hist = xc_ref[...]
            else:
                x_hist = jnp.zeros((C_in, pw), cd)
            # pw is a multiple of 128 -> tile-aligned concat (no full-width
            # lane rotate of x_tile).
            x_ext = jnp.concatenate([x_hist, x_tile], axis=-1)  # (C_in, pw+TL)
        else:
            x_ext = x_tile

        # ---- conv1 (causal dilated) [+ fused 1x1 downsample rows] + ReLU ---
        if fuse_im2col:
            if K > 1:
                x_col = jnp.concatenate(causal_views(x_ext, x_tile), axis=0)
            else:
                x_col = x_tile
            h = jnp.dot(w1_ref[...], x_col,
                        preferred_element_type=jnp.float32) + b1_ref[...]
            if has_downsample:
                h1 = jnp.maximum(h[:C_out], 0.0)            # conv1 rows
                res = h[C_out:]                             # 1x1 downsample rows
            else:
                h1 = jnp.maximum(h, 0.0)
                res = x_in.astype(jnp.float32)
        else:
            xv = causal_views(x_ext, x_tile)
            h1 = jnp.dot(w1_ref[K - 1], xv[K - 1],
                         preferred_element_type=jnp.float32)
            for k in range(K - 1):
                h1 = h1 + jnp.dot(w1_ref[k], xv[k],
                                  preferred_element_type=jnp.float32)
            h1 = jnp.maximum(h1 + b1_ref[...], 0.0)
            if has_downsample:
                res = jnp.dot(wd_ref[...], x_tile,
                              preferred_element_type=jnp.float32) + bd_ref[...]
            else:
                res = x_in.astype(jnp.float32)
        # dropout1: identity (eval mode)
        h1_c = h1.astype(cd)

        # ---- conv2 (causal dilated) + ReLU ----------------------------------
        if p > 0:
            h_hist = hc_ref[...] if use_carry else jnp.zeros((C_out, pw), cd)
            h_ext = jnp.concatenate([h_hist, h1_c], axis=-1)     # (C_out, pw+TL)
        else:
            h_ext = h1_c
        if fuse_im2col:
            if K > 1:
                h_col = jnp.concatenate(causal_views(h_ext, h1_c), axis=0)
            else:
                h_col = h1_c
            out2 = jnp.dot(w2_ref[...], h_col,
                           preferred_element_type=jnp.float32)
        else:
            hv = causal_views(h_ext, h1_c)
            out2 = jnp.dot(w2_ref[K - 1], hv[K - 1],
                           preferred_element_type=jnp.float32)
            for k in range(K - 1):
                out2 = out2 + jnp.dot(w2_ref[k], hv[k],
                                      preferred_element_type=jnp.float32)
        out2 = jnp.maximum(out2 + b2_ref[...], 0.0)
        # dropout2: identity (eval mode)

        # ---- residual add + final ReLU --------------------------------------
        o_ref[0] = jnp.maximum(out2 + res, 0.0).astype(o_ref.dtype)

        # ---- carry trailing history to the next time tile of this batch ----
        if use_carry:
            # 128-aligned full-width update; also correct when pw > TL.
            xc_ref[...] = x_ext[:, TL:TL + pw]
            hc_ref[...] = h_ext[:, TL:TL + pw]

    return body


def temporal_block_forward(x_ncl, params, *, kernel_size, stride, dilation,
                           padding, compute_dtype=jnp.bfloat16, tl_target=1024):
    """Forward pass of TemporalBlock (eval mode).

    x_ncl:  (N, C_in, L), PyTorch NCL convention (f32 or bf16 activations).
    params: (w1, b1, w2, b2, wd, bd); wd/bd may be None (identity residual,
            requires C_in == C_out).
    """
    assert stride == 1, "only stride=1 supported (standard TCN setting)"
    K, d, p = kernel_size, dilation, padding
    assert p == (K - 1) * d, (
        "TemporalBlock needs padding == (kernel_size-1)*dilation so the "
        "chomped conv output length matches the residual")
    w1, b1, w2, b2, wd, bd = params
    N, C_in, L = x_ncl.shape
    C_out = w1.shape[0]
    has_downsample = wd is not None
    if not has_downsample:
        assert C_in == C_out, "identity residual requires C_in == C_out"

    cd = compute_dtype
    f32 = jnp.float32
    # Narrow channels: fused K*C im2col contraction fills the MXU better.
    # Wide channels: K accumulated dots, no im2col concat copies.
    fuse_im2col = max(C_in, C_out) < 128

    vmem_limit = _pick_vmem_limit_bytes()
    x_bytes = jnp.dtype(x_ncl.dtype).itemsize
    cd_bytes = jnp.dtype(cd).itemsize
    TL = _choose_time_tile(L, C_in, C_out, x_bytes, cd_bytes, tl_target,
                           vmem_limit)
    num_l = pl.cdiv(L, TL)
    pw = _round_up(p, 128) if p > 0 else 0       # lane-aligned history width
    use_carry = (p > 0) and (num_l > 1)

    if fuse_im2col:
        # im2col-flattened conv1 weights: W[o, k*C_in + c] = w1[o, c, k]; the
        # 1x1 downsample is stacked as C_out extra rows hitting only the
        # k = K-1 (unshifted) block.
        w1_flat = jnp.transpose(w1, (0, 2, 1)).reshape(C_out, K * C_in)
        if has_downsample:
            wd_rows = jnp.zeros((C_out, K * C_in), w1.dtype)
            wd_rows = wd_rows.at[:, (K - 1) * C_in:].set(wd[:, :, 0])
            w1_mat = jnp.concatenate([w1_flat, wd_rows], axis=0).astype(cd)
            b1_col = jnp.concatenate([b1, bd]).reshape(-1, 1).astype(f32)
        else:
            w1_mat = w1_flat.astype(cd)
            b1_col = b1.reshape(-1, 1).astype(f32)
        w2_mat = jnp.transpose(w2, (0, 2, 1)).reshape(C_out, K * C_out).astype(cd)
    else:
        w1_mat = jnp.transpose(w1, (2, 0, 1)).astype(cd)     # (K, C_out, C_in)
        w2_mat = jnp.transpose(w2, (2, 0, 1)).astype(cd)     # (K, C_out, C_out)
        b1_col = b1.reshape(-1, 1).astype(f32)
    b2_col = b2.reshape(-1, 1).astype(f32)

    def const_spec(shape):
        # Same weight/bias block for every grid step.
        # TODO(synk): pipeline_mode=pl.Buffered(1) here once supported at the
        #             top level -- no need to double-buffer constants.
        if len(shape) == 3:
            return pl.BlockSpec(shape, lambda n, l: (0, 0, 0))
        return pl.BlockSpec(shape, lambda n, l: (0, 0))

    inputs = [x_ncl, w1_mat, b1_col, w2_mat, b2_col]
    in_specs = [
        pl.BlockSpec((1, C_in, TL), lambda n, l: (n, 0, l)),
        const_spec(w1_mat.shape), const_spec(b1_col.shape),
        const_spec(w2_mat.shape), const_spec(b2_col.shape),
    ]
    if (not fuse_im2col) and has_downsample:
        wd_mat = wd[:, :, 0].astype(cd)                      # (C_out, C_in)
        bd_col = bd.reshape(-1, 1).astype(f32)
        inputs += [wd_mat, bd_col]
        in_specs += [const_spec(wd_mat.shape), const_spec(bd_col.shape)]

    scratch_shapes = []
    if use_carry:
        scratch_shapes = [pltpu.VMEM((C_in, pw), cd),        # x history
                          pltpu.VMEM((C_out, pw), cd)]       # relu(conv1) history

    kernel = _make_temporal_block_kernel(
        C_in=C_in, C_out=C_out, TL=TL, K=K, d=d, p=p, pw=pw,
        fuse_im2col=fuse_im2col, has_downsample=has_downsample,
        use_carry=use_carry, cd=cd)

    out = pl.pallas_call(
        kernel,
        out_shape=jax.ShapeDtypeStruct((N, C_out, L), x_ncl.dtype),
        grid_spec=pltpu.PrefetchScalarGridSpec(
            num_scalar_prefetch=0,
            grid=(N, num_l),
            in_specs=in_specs,
            out_specs=pl.BlockSpec((1, C_out, TL), lambda n, l: (n, 0, l)),
            scratch_shapes=scratch_shapes,
        ),
        compiler_params=pltpu.CompilerParams(
            # batch is independent (megacore / v7x 2nd TensorCore); the time
            # axis carries causal state in scratch so it must stay sequential.
            dimension_semantics=("parallel", "arbitrary"),
            vmem_limit_bytes=vmem_limit,
        ),
    )(*inputs)
    return out


def _reference_forward(x_ncl, params, *, dilation, padding):
    """Pure-JAX reference mirroring the PyTorch module (eval mode)."""
    w1, b1, w2, b2, wd, bd = params
    L = x_ncl.shape[-1]

    def conv1d(x, w, b, dil, pad):
        y = lax.conv_general_dilated(
            x, w, window_strides=(1,), padding=[(pad, pad)],
            rhs_dilation=(dil,), dimension_numbers=("NCH", "OIH", "NCH"))
        return y + b[None, :, None]

    out = conv1d(x_ncl, w1, b1, dilation, padding)[:, :, :L]   # chomp1
    out = jnp.maximum(out, 0.0)
    out = conv1d(out, w2, b2, dilation, padding)[:, :, :L]     # chomp2
    out = jnp.maximum(out, 0.0)
    res = x_ncl if wd is None else conv1d(x_ncl, wd, bd, 1, 0)
    return jnp.maximum(out + res, 0.0)


if __name__ == "__main__":
    root_key = jax.random.PRNGKey(0)

    def make_params(key, C_in, C_out, K, with_downsample):
        ks = jax.random.split(key, 6)
        w1 = 0.01 * jax.random.normal(ks[0], (C_out, C_in, K), jnp.float32)
        b1 = 0.05 * jax.random.normal(ks[1], (C_out,), jnp.float32)
        w2 = 0.01 * jax.random.normal(ks[2], (C_out, C_out, K), jnp.float32)
        b2 = 0.05 * jax.random.normal(ks[3], (C_out,), jnp.float32)
        if with_downsample:
            wd = 0.01 * jax.random.normal(ks[4], (C_out, C_in, 1), jnp.float32)
            bd = 0.05 * jax.random.normal(ks[5], (C_out,), jnp.float32)
        else:
            wd, bd = None, None
        return (w1, b1, w2, b2, wd, bd)

    def run_case(name, key, *, N, C_in, C_out, L, K, dil, compute_dtype,
                 tl_target, atol, rtol, act_dtype=jnp.float32):
        kp, kx = jax.random.split(key)
        pad = (K - 1) * dil
        params = make_params(kp, C_in, C_out, K,
                             with_downsample=(C_in != C_out))
        x = jax.random.normal(kx, (N, C_in, L), jnp.float32).astype(act_dtype)
        out = temporal_block_forward(
            x, params, kernel_size=K, stride=1, dilation=dil, padding=pad,
            compute_dtype=compute_dtype, tl_target=tl_target)
        out = jax.block_until_ready(out)
        ref = _reference_forward(x.astype(jnp.float32), params,
                                 dilation=dil, padding=pad)
        assert out.shape == (N, C_out, L), f"bad shape: {name}"
        assert out.dtype == x.dtype, f"bad dtype: {name}"
        err = float(jnp.max(jnp.abs(out.astype(jnp.float32) - ref)))
        assert jnp.allclose(out.astype(jnp.float32), ref,
                            atol=atol, rtol=rtol), (
            f"mismatch: {name} (max abs err {err})")

    keys = jax.random.split(root_key, 7)
    # fused-im2col path, 1x1 downsample folded into conv1, single time tile
    run_case("f32_small", keys[0], N=2, C_in=4, C_out=8, L=16, K=3, dil=1,
             compute_dtype=jnp.float32, tl_target=512, atol=1e-3, rtol=1e-2)
    # identity residual path (C_in == C_out -> downsample is None)
    run_case("identity_residual", keys[1], N=2, C_in=8, C_out=8, L=16, K=3,
             dil=1, compute_dtype=jnp.float32, tl_target=512, atol=1e-3,
             rtol=1e-2)
    # multi time-tile path: exercises the 128-aligned causal carry
    run_case("tiled_time_axis", keys[2], N=2, C_in=4, C_out=8, L=512, K=3,
             dil=2, compute_dtype=jnp.float32, tl_target=128, atol=1e-3,
             rtol=1e-2)
    # L not a multiple of the time tile: ragged last block + carry reset
    run_case("ragged_time_tiles", keys[3], N=2, C_in=4, C_out=8, L=200, K=3,
             dil=2, compute_dtype=jnp.float32, tl_target=128, atol=1e-3,
             rtol=1e-2)
    # wide channels: split-dots path (no im2col concat), identity residual
    run_case("wide_identity_split", keys[4], N=2, C_in=128, C_out=128, L=256,
             K=3, dil=2, compute_dtype=jnp.float32, tl_target=128, atol=5e-3,
             rtol=2e-2)
    # wide channels + downsample, bf16 MXU operands and bf16 activations I/O
    run_case("wide_downsample_bf16", keys[5], N=2, C_in=64, C_out=128, L=256,
             K=3, dil=1, compute_dtype=jnp.bfloat16, tl_target=128, atol=3e-2,
             rtol=2e-1, act_dtype=jnp.bfloat16)
    # bf16 MXU operands with f32 activations (default compute dtype)
    run_case("bf16_matmul", keys[6], N=2, C_in=4, C_out=8, L=16, K=3, dil=1,
             compute_dtype=jnp.bfloat16, tl_target=512, atol=3e-2, rtol=2e-1)

    print("KERNEL_OK")
</pallas_src>

<mosaic_0001>
module attributes {stable_mosaic.version = 11 : i64} {
  func.func @body(%arg0: i32, %arg1: i32, %arg2: memref<1x4x16xf32, #tpu.memory_space<vmem>>, %arg3: memref<16x12xf32, #tpu.memory_space<vmem>>, %arg4: memref<16x1xf32, #tpu.memory_space<vmem>>, %arg5: memref<8x24xf32, #tpu.memory_space<vmem>>, %arg6: memref<8x1xf32, #tpu.memory_space<vmem>>, %arg7: memref<1x8x16xf32, #tpu.memory_space<vmem>>) attributes {dimension_semantics = [#tpu.dimension_semantics<parallel>, #tpu.dimension_semantics<arbitrary>], iteration_bounds = array<i64: 2, 1>, scalar_prefetch = 0 : i64, scratch_operands = 0 : i64, tpu.core_type = #tpu.core_type<tc>, window_params = [{transform_indices = @transform_0, window_bounds = array<i64: 1, 4, 16>}, {pipeline_mode = #tpu.pipeline_mode<synchronous>, transform_indices = @transform_1, window_bounds = array<i64: 16, 12>}, {pipeline_mode = #tpu.pipeline_mode<synchronous>, transform_indices = @transform_2, window_bounds = array<i64: 16, 1>}, {pipeline_mode = #tpu.pipeline_mode<synchronous>, transform_indices = @transform_3, window_bounds = array<i64: 8, 24>}, {pipeline_mode = #tpu.pipeline_mode<synchronous>, transform_indices = @transform_4, window_bounds = array<i64: 8, 1>}, {transform_indices = @transform_5, window_bounds = array<i64: 1, 8, 16>}]} {
    %c0 = arith.constant 0 : index
    %c0_0 = arith.constant 0 : index
    %c0_1 = arith.constant 0 : index
    %0 = vector.load %arg2[%c0, %c0_0, %c0_1] : memref<1x4x16xf32, #tpu.memory_space<vmem>>, vector<1x4x16xf32>
    %1 = vector.shape_cast %0 : vector<1x4x16xf32> to vector<4x16xf32>
    %cst = arith.constant 0.000000e+00 : f32
    %2 = vector.broadcast %cst : f32 to vector<4x128xf32>
    %3 = tpu.concatenate %2, %1 in 1 : vector<4x128xf32>, vector<4x16xf32> -> vector<4x144xf32>
    %4 = vector.extract_strided_slice %3 {offsets = [0, 126], sizes = [4, 16], strides = [1, 1]} : vector<4x144xf32> to vector<4x16xf32>
    %5 = vector.extract_strided_slice %3 {offsets = [0, 127], sizes = [4, 16], strides = [1, 1]} : vector<4x144xf32> to vector<4x16xf32>
    %6 = tpu.concatenate %4, %5, %1 in 0 : vector<4x16xf32>, vector<4x16xf32>, vector<4x16xf32> -> vector<12x16xf32>
    %c0_2 = arith.constant 0 : index
    %c0_3 = arith.constant 0 : index
    %7 = vector.load %arg3[%c0_2, %c0_3] : memref<16x12xf32, #tpu.memory_space<vmem>>, vector<16x12xf32>
    %cst_4 = arith.constant dense<0.000000e+00> : vector<16x16xf32>
    %8 = tpu.matmul %7, %6, %cst_4 {dimension_numbers = #tpu.dot_dimension_numbers<[1], [0], [0], [1], [0, 0, 1, 1], [], []>} : vector<16x12xf32>, vector<12x16xf32>, vector<16x16xf32> -> vector<16x16xf32>
    %c0_5 = arith.constant 0 : index
    %c0_6 = arith.constant 0 : index
    %9 = vector.load %arg4[%c0_5, %c0_6] : memref<16x1xf32, #tpu.memory_space<vmem>>, vector<16x1xf32>
    %10 = vector.broadcast %9 : vector<16x1xf32> to vector<16x16xf32>
    %11 = arith.addf %8, %10 : vector<16x16xf32>
    %12 = vector.extract_strided_slice %11 {offsets = [0, 0], sizes = [8, 16], strides = [1, 1]} : vector<16x16xf32> to vector<8x16xf32>
    %cst_7 = arith.constant 0.000000e+00 : f32
    %13 = vector.broadcast %cst_7 : f32 to vector<8x16xf32>
    %14 = arith.maximumf %12, %13 : vector<8x16xf32>
    %15 = vector.extract_strided_slice %11 {offsets = [8, 0], sizes = [8, 16], strides = [1, 1]} : vector<16x16xf32> to vector<8x16xf32>
    %cst_8 = arith.constant 0.000000e+00 : f32
    %16 = vector.broadcast %cst_8 : f32 to vector<8x128xf32>
    %17 = tpu.concatenate %16, %14 in 1 : vector<8x128xf32>, vector<8x16xf32> -> vector<8x144xf32>
    %18 = vector.extract_strided_slice %17 {offsets = [0, 126], sizes = [8, 16], strides = [1, 1]} : vector<8x144xf32> to vector<8x16xf32>
    %19 = vector.extract_strided_slice %17 {offsets = [0, 127], sizes = [8, 16], strides = [1, 1]} : vector<8x144xf32> to vector<8x16xf32>
    %20 = tpu.concatenate %18, %19, %14 in 0 : vector<8x16xf32>, vector<8x16xf32>, vector<8x16xf32> -> vector<24x16xf32>
    %c0_9 = arith.constant 0 : index
    %c0_10 = arith.constant 0 : index
    %21 = vector.load %arg5[%c0_9, %c0_10] : memref<8x24xf32, #tpu.memory_space<vmem>>, vector<8x24xf32>
    %cst_11 = arith.constant dense<0.000000e+00> : vector<8x16xf32>
    %22 = tpu.matmul %21, %20, %cst_11 {dimension_numbers = #tpu.dot_dimension_numbers<[1], [0], [0], [1], [0, 0, 1, 1], [], []>} : vector<8x24xf32>, vector<24x16xf32>, vector<8x16xf32> -> vector<8x16xf32>
    %c0_12 = arith.constant 0 : index
    %c0_13 = arith.constant 0 : index
    %23 = vector.load %arg6[%c0_12, %c0_13] : memref<8x1xf32, #tpu.memory_space<vmem>>, vector<8x1xf32>
    %24 = vector.broadcast %23 : vector<8x1xf32> to vector<8x16xf32>
    %25 = arith.addf %22, %24 : vector<8x16xf32>
    %cst_14 = arith.constant 0.000000e+00 : f32
    %26 = vector.broadcast %cst_14 : f32 to vector<8x16xf32>
    %27 = arith.maximumf %25, %26 : vector<8x16xf32>
    %28 = arith.addf %27, %15 : vector<8x16xf32>
    %cst_15 = arith.constant 0.000000e+00 : f32
    %29 = vector.broadcast %cst_15 : f32 to vector<8x16xf32>
    %30 = arith.maximumf %28, %29 : vector<8x16xf32>
    %c0_16 = arith.constant 0 : index
    %c0_17 = arith.constant 0 : index
    %c0_18 = arith.constant 0 : index
    %31 = vector.load %arg7[%c0_16, %c0_17, %c0_18] : memref<1x8x16xf32, #tpu.memory_space<vmem>>, vector<1x8x16xf32>
    %32 = vector.shape_cast %31 : vector<1x8x16xf32> to vector<8x16xf32>
    %33 = vector.shape_cast %30 : vector<8x16xf32> to vector<1x8x16xf32>
    tpu.vector_store %arg7[%c0_16, %c0_17, %c0_18], %33 {strides = array<i32>} : memref<1x8x16xf32, #tpu.memory_space<vmem>>, vector<1x8x16xf32>,
    return
  }
  func.func @transform_0(%arg0: i32, %arg1: i32) -> (i32, i32, i32) {
    %c0_i32 = arith.constant 0 : i32
    %c0_i32_0 = arith.constant 0 : i32
    return %arg0, %c0_i32, %arg1 : i32, i32, i32
  }
  func.func @transform_1(%arg0: i32, %arg1: i32) -> (i32, i32) {
    %c0_i32 = arith.constant 0 : i32
    %c0_i32_0 = arith.constant 0 : i32
    %c0_i32_1 = arith.constant 0 : i32
    return %c0_i32, %c0_i32_0 : i32, i32
  }
  func.func @transform_2(%arg0: i32, %arg1: i32) -> (i32, i32) {
    %c0_i32 = arith.constant 0 : i32
    %c0_i32_0 = arith.constant 0 : i32
    %c0_i32_1 = arith.constant 0 : i32
    return %c0_i32, %c0_i32_0 : i32, i32
  }
  func.func @transform_3(%arg0: i32, %arg1: i32) -> (i32, i32) {
    %c0_i32 = arith.constant 0 : i32
    %c0_i32_0 = arith.constant 0 : i32
    %c0_i32_1 = arith.constant 0 : i32
    return %c0_i32, %c0_i32_0 : i32, i32
  }
  func.func @transform_4(%arg0: i32, %arg1: i32) -> (i32, i32) {
    %c0_i32 = arith.constant 0 : i32
    %c0_i32_0 = arith.constant 0 : i32
    %c0_i32_1 = arith.constant 0 : i32
    return %c0_i32, %c0_i32_0 : i32, i32
  }
  func.func @transform_5(%arg0: i32, %arg1: i32) -> (i32, i32, i32) {
    %c0_i32 = arith.constant 0 : i32
    %c0_i32_0 = arith.constant 0 : i32
    return %arg0, %c0_i32, %arg1 : i32, i32, i32
  }
}

</mosaic_0001>

<llo_original>
// kernel: tpu_custom_call.1
$region0: #{tpu_custom_call.1}
  #allocation0 [shape = 'u32[]', space=smem, size = 0x4, offset = 0x4, fixed_abs, tag = 'smem constant byte address 0x4 - core index']
  #allocation1 [shape = 'u32[72,128]{1,0:T(1,128)}', space=vmem, size = 0x9000, scoped, tag = 'internal scratch']
  %s0 = inlined_call_operand.vmem [shape: f32[2,4,16], index: 0, kind: input, shape index: {}]
  %s1 = inlined_call_operand.vmem [shape: f32[16,12], index: 1, kind: input, shape index: {}]
  %s2 = inlined_call_operand.vmem [shape: f32[16,1], index: 2, kind: input, shape index: {}]
  %s3 = inlined_call_operand.hbm [shape: f32[8,24], index: 3, kind: input, shape index: {}]
  %s4 = inlined_call_operand.vmem [shape: f32[8,1], index: 4, kind: input, shape index: {}]
  %s5 = inlined_call_operand.hbm [shape: f32[2,8,16], index: 5, kind: output, shape index: {}]
  %s6 = sld [smem:[#allocation0]]
  $region57: #{tpu_custom_call.1} parent=0
    _
  %s8 = ssub.s32 1, %s6
  %s9 = scalar_select 0, %s8, %s6
  $region1: #{tpu_custom_call.1} parent=0
    #allocation2 [shape = 'u8[4096]{0}', space=vmem, size = 0x1000, scoped, tag = 'input window, operand 3, single buffered']
    #allocation3 [shape = 's32[2]{0}', space=sflag, size = 0x8, scoped, tag = 'scoped memory for tpu_custom_call.1']
    #allocation4 [shape = 's32[2]{0}', space=sflag, size = 0x8, scoped, tag = 'scoped memory for tpu_custom_call.1']
    #allocation5 [shape = 'u8[8192]{0}', space=vmem, size = 0x2000, scoped, tag = 'output window, operand 0']
    %10 = vsyncpa [#allocation3], 0
    %11 = vsyncpa [#allocation4], 0
    %s12 = scalar_lea.sflag [#allocation4], 1
    %13 = vsyncpa %s12, 0
    loop: start=0, step=1, limit=4
    $region2: #{tpu_custom_call.1} parent=1 // loop_pre_header
      _
    $region3: #{tpu_custom_call.1} parent=1 // loop_header
      %s15 = sphi 0, %s19
      %p16 = scmp.ge.s32.totalorder %s15, 4
      %s22 = sphi 0, %s34
      %s23 = sphi 0, %s30
      %s24 = sphi 0, %s22
      %s25 = sphi 0, %s23
      %s26 = sphi 0, %s24
      %s27 = sphi 0, %s25
      %s39 = sphi 0, %s41
      %s42 = sphi 0, %s39
      %s43 = sphi 0, %s42
      %s59 = sphi 0, %s43
      %s63 = sphi 0, %s63
      %s65 = sphi 0, %s63
      %s66 = sphi 0, %s65
      %s80 = sphi 0, %s66
      %s84 = sphi 0, %s84
      %s86 = sphi 0, %s84
      %s87 = sphi 0, %s86
      %s101 = sphi 0, %s87
      %s105 = sphi 0, %s105
      %s107 = sphi 0, %s105
      %s108 = sphi 0, %s107
      %s122 = sphi 0, %s108
      %s126 = sphi 0, %s126
      %s128 = sphi 0, %s126
      %s129 = sphi 0, %s128
      %s143 = sphi 0, %s129
      %s151 = sphi 0, %s153
      %s154 = sphi 0, %s151
      %s155 = sphi 0, %s154
      %s171 = sphi 0, %s155
    $region4: #{tpu_custom_call.1} parent=1 // loop_header_branch
      %18 = sbr.rel (%p16) target = $region8
    $region5: #{tpu_custom_call.1} parent=1 // loop_body
      %s20 = ssub.s32 %s15, 1
      %s21 = ssub.s32 %s15, 2
      %s28 = sadd.s32 1, %s23
      %p29 = scmp.ge.s32.totalorder %s28, 1
      %s30 = scalar_select %p29, 0, %s28
      %s31 = sadd.s32 1, %s22
      %s32 = scalar_select %p29, %s31, %s22
      %p33 = scmp.ge.s32.totalorder %s32, 2
      %s34 = scalar_select %p33, 0, %s32
      %s35 = ssub.s32 %s22, %s34
      %s36 = ssub.s32 %s23, %s30
      %s37 = sor.u32 %s35, %s36
      %p38 = scmp.eq.s32.totalorder %s37, 0
      %s40 = sadd.s32 %s39, 1
      %s41 = scalar_select %p38, %s39, %s40
      %p44 = pneg %p38
      %p45 = scmp.eq.s32.totalorder %s15, 1
      %p46 = por %p44, %p45
      %p47 = scmp.ne.s32.totalorder %s39, %s42
      %p48 = scmp.eq.s32.totalorder %s15, 0
      %p49 = por %p47, %p48
      %p50 = scmp.ne.s32.totalorder %s39, %s42
      %p51 = scmp.eq.s32.totalorder %s20, 1
      %p52 = por %p50, %p51
      %p53 = scmp.ne.s32.totalorder %s42, %s43
      %p54 = scmp.eq.s32.totalorder %s20, 0
      %p55 = por %p53, %p54
      %p56 = scmp.ne.s32.totalorder %s42, %s43
      %p57 = scmp.eq.s32.totalorder %s21, 1
      %p58 = por %p56, %p57
      %p60 = scmp.ne.s32.totalorder %s43, %s59
      %p61 = scmp.eq.s32.totalorder %s21, 0
      %p62 = por %p60, %p61
      %s64 = sadd.s32 %s63, 1
      %p67 = scmp.eq.s32.totalorder %s15, 1
      %p68 = scmp.ne.s32.totalorder %s63, %s65
      %p69 = scmp.eq.s32.totalorder %s15, 0
      %p70 = por %p68, %p69
      %p71 = scmp.ne.s32.totalorder %s63, %s65
      %p72 = scmp.eq.s32.totalorder %s20, 1
      %p73 = por %p71, %p72
      %p74 = scmp.ne.s32.totalorder %s65, %s66
      %p75 = scmp.eq.s32.totalorder %s20, 0
      %p76 = por %p74, %p75
      %p77 = scmp.ne.s32.totalorder %s65, %s66
      %p78 = scmp.eq.s32.totalorder %s21, 1
      %p79 = por %p77, %p78
      %p81 = scmp.ne.s32.totalorder %s66, %s80
      %p82 = scmp.eq.s32.totalorder %s21, 0
      %p83 = por %p81, %p82
      %s85 = sadd.s32 %s84, 1
      %p88 = scmp.eq.s32.totalorder %s15, 1
      %p89 = scmp.ne.s32.totalorder %s84, %s86
      %p90 = scmp.eq.s32.totalorder %s15, 0
      %p91 = por %p89, %p90
      %p92 = scmp.ne.s32.totalorder %s84, %s86
      %p93 = scmp.eq.s32.totalorder %s20, 1
      %p94 = por %p92, %p93
      %p95 = scmp.ne.s32.totalorder %s86, %s87
      %p96 = scmp.eq.s32.totalorder %s20, 0
      %p97 = por %p95, %p96
      %p98 = scmp.ne.s32.totalorder %s86, %s87
      %p99 = scmp.eq.s32.totalorder %s21, 1
      %p100 = por %p98, %p99
      %p102 = scmp.ne.s32.totalorder %s87, %s101
      %p103 = scmp.eq.s32.totalorder %s21, 0
      %p104 = por %p102, %p103
      %s106 = sadd.s32 %s105, 1
      %p109 = scmp.eq.s32.totalorder %s15, 1
      %p110 = scmp.ne.s32.totalorder %s105, %s107
      %p111 = scmp.eq.s32.totalorder %s15, 0
      %p112 = por %p110, %p111
      %p113 = scmp.ne.s32.totalorder %s105, %s107
      %p114 = scmp.eq.s32.totalorder %s20, 1
      %p115 = por %p113, %p114
      %p116 = scmp.ne.s32.totalorder %s107, %s108
      %p117 = scmp.eq.s32.totalorder %s20, 0
      %p118 = por %p116, %p117
      %p119 = scmp.ne.s32.totalorder %s107, %s108
      %p120 = scmp.eq.s32.totalorder %s21, 1
      %p121 = por %p119, %p120
      %p123 = scmp.ne.s32.totalorder %s108, %s122
      %p124 = scmp.eq.s32.totalorder %s21, 0
      %p125 = por %p123, %p124
      %s127 = sadd.s32 %s126, 1
      %p130 = scmp.eq.s32.totalorder %s15, 1
      %p131 = scmp.ne.s32.totalorder %s126, %s128
      %p132 = scmp.eq.s32.totalorder %s15, 0
      %p133 = por %p131, %p132
      %p134 = scmp.ne.s32.totalorder %s126, %s128
      %p135 = scmp.eq.s32.totalorder %s20, 1
      %p136 = por %p134, %p135
      %p137 = scmp.ne.s32.totalorder %s128, %s129
      %p138 = scmp.eq.s32.totalorder %s20, 0
      %p139 = por %p137, %p138
      %p140 = scmp.ne.s32.totalorder %s128, %s129
      %p141 = scmp.eq.s32.totalorder %s21, 1
      %p142 = por %p140, %p141
      %p144 = scmp.ne.s32.totalorder %s129, %s143
      %p145 = scmp.eq.s32.totalorder %s21, 0
      %p146 = por %p144, %p145
      %s147 = ssub.s32 %s22, %s34
      %s148 = ssub.s32 %s23, %s30
      %s149 = sor.u32 %s147, %s148
      %p150 = scmp.eq.s32.totalorder %s149, 0
      %s152 = sadd.s32 %s151, 1
      %s153 = scalar_select %p150, %s151, %s152
      %p156 = pneg %p150
      %p157 = scmp.eq.s32.totalorder %s15, 1
      %p158 = por %p156, %p157
      %p159 = scmp.ne.s32.totalorder %s151, %s154
      %p160 = scmp.eq.s32.totalorder %s15, 0
      %p161 = por %p159, %p160
      %p162 = scmp.ne.s32.totalorder %s151, %s154
      %p163 = scmp.eq.s32.totalorder %s20, 1
      %p164 = por %p162, %p163
      %p165 = scmp.ne.s32.totalorder %s154, %s155
      %p166 = scmp.eq.s32.totalorder %s20, 0
      %p167 = por %p165, %p166
      %p168 = scmp.ne.s32.totalorder %s154, %s155
      %p169 = scmp.eq.s32.totalorder %s21, 1
      %p170 = por %p168, %p169
      %p172 = scmp.ne.s32.totalorder %s155, %s171
      %p173 = scmp.eq.s32.totalorder %s21, 0
      %p174 = por %p172, %p173
      %p175 = scmp.le.s32.totalorder 1, %s15
      %p176 = scmp.lt.s32.totalorder %s15, 3
      %p177 = pnand %p175, %p176
      %p178 = pneg %p177
      // Predicated region
      $region9: #{tpu_custom_call.1} parent=5 // pred_check
        _
      $region10: #{tpu_custom_call.1} parent=5 // pred_check_branch
        %180 = sbr.rel (%p177) target = $region12
      $region11: #{tpu_custom_call.1} parent=5 // pred_region
        %s181 = ssub.s32 %s15, 1
        // Predicated region
        $region13: #{tpu_custom_call.1} parent=11 // pred_check
          %p182 = pneg %p76
        $region14: #{tpu_custom_call.1} parent=11 // pred_check_branch
          %184 = sbr.rel (%p182) target = $region16
        $region15: #{tpu_custom_call.1} parent=11 // pred_region
          _
        $region16: #{tpu_custom_call.1} parent=11 // pred_fallthru
          _
        // Predicated region
        $region17: #{tpu_custom_call.1} parent=11 // pred_check
          %p185 = pneg %p97
        $region18: #{tpu_custom_call.1} parent=11 // pred_check_branch
          %187 = sbr.rel (%p185) target = $region20
        $region19: #{tpu_custom_call.1} parent=11 // pred_region
          _
        $region20: #{tpu_custom_call.1} parent=11 // pred_fallthru
          _
        // Predicated region
        $region21: #{tpu_custom_call.1} parent=11 // pred_check
          %p188 = pneg %p118
        $region22: #{tpu_custom_call.1} parent=11 // pred_check_branch
          %190 = sbr.rel (%p188) target = $region24
        $region23: #{tpu_custom_call.1} parent=11 // pred_region
          %192 = vsyncadd [#allocation3], 0
          %s194 = sshll.u32 %s3, 4
          %s195 = int_to_ptr.hbm [resolvable:$true] %s194
          %s196 = sshll.u32 [#allocation2], 4
          %s197 = int_to_ptr.vmem [resolvable:$true] %s196
          %199 = dma.hbm_to_vmem [thread:$0]  %s195, 128, %s197, [#allocation3]
        $region24: #{tpu_custom_call.1} parent=11 // pred_fallthru
          _
        // Predicated region
        $region25: #{tpu_custom_call.1} parent=11 // pred_check
          %p200 = pneg %p139
        $region26: #{tpu_custom_call.1} parent=11 // pred_check_branch
          %202 = sbr.rel (%p200) target = $region28
        $region27: #{tpu_custom_call.1} parent=11 // pred_region
          _
        $region28: #{tpu_custom_call.1} parent=11 // pred_fallthru
          _
      $region12: #{tpu_custom_call.1} parent=5 // pred_fallthru
        _
      %p203 = scmp.lt.s32.totalorder %s15, 2
      // Predicated region
      $region29: #{tpu_custom_call.1} parent=5 // pred_check
        %p204 = pneg %p203
      $region30: #{tpu_custom_call.1} parent=5 // pred_check_branch
        %206 = sbr.rel (%p204) target = $region32
      $region31: #{tpu_custom_call.1} parent=5 // pred_region
        // Predicated region
        $region33: #{tpu_custom_call.1} parent=31 // pred_check
          %p207 = pneg %p49
        $region34: #{tpu_custom_call.1} parent=31 // pred_check_branch
          %209 = sbr.rel (%p207) target = $region36
        $region35: #{tpu_custom_call.1} parent=31 // pred_region
          %p210 = scmp.lt.s32.totalorder %s22, 1
          %s211 = scalar_select %p210, %s22, 1
          %p212 = scmp.lt.s32.totalorder %s23, 0
          %s213 = scalar_select %p212, %s23, 0
          %s214 = sadd.s32 %s213, %s211
          %s215 = smul.addr %s214, 4
          %s216 = scalar_lea.vmem %s0, %s215
        $region36: #{tpu_custom_call.1} parent=31 // pred_fallthru
          _
      $region32: #{tpu_custom_call.1} parent=5 // pred_fallthru
        _
      %p217 = scmp.le.s32.totalorder 1, %s15
      %p218 = scmp.lt.s32.totalorder %s15, 3
      %p219 = pnand %p217, %p218
      %p220 = pneg %p219
      // Predicated region
      $region37: #{tpu_custom_call.1} parent=5 // pred_check
        _
      $region38: #{tpu_custom_call.1} parent=5 // pred_check_branch
        %222 = sbr.rel (%p219) target = $region40
      $region39: #{tpu_custom_call.1} parent=5 // pred_region
        %s223 = ssub.s32 %s15, 1
        // Predicated region
        $region41: #{tpu_custom_call.1} parent=39 // pred_check
          %p224 = pneg %p118
        $region42: #{tpu_custom_call.1} parent=39 // pred_check_branch
          %226 = sbr.rel (%p224) target = $region44
        $region43: #{tpu_custom_call.1} parent=39 // pred_region
          %228 = dma.done [#allocation3], 128
        $region44: #{tpu_custom_call.1} parent=39 // pred_fallthru
          _
        %p229 = scmp.lt.s32.totalorder %s24, 1
        %s230 = scalar_select %p229, %s24, 1
        %p231 = scmp.lt.s32.totalorder %s25, 0
        %s232 = scalar_select %p231, %s25, 0
        %s233 = sadd.s32 %s232, %s230
        %s234 = smul.addr %s233, 4
        %s235 = scalar_lea.vmem %s0, %s234
        %p236 = pneg %p55
        %p237 = pneg %p52
        %p238 = pneg %p76
        %p239 = pneg %p73
        %p240 = pneg %p97
        %p241 = pneg %p94
        %p242 = pneg %p118
        %p243 = pneg %p115
        %p244 = pneg %p139
        %p245 = pneg %p136
        %p246 = pneg %p167
        %p247 = pneg %p164
        %s248 = sand.u32 %s154, 1
        %s249 = scalar_lea.sflag [#allocation4], %s248
        %s250 = sand.u32 %s154, 1
        %s251 = smul.addr %s250, 8
        %s252 = scalar_lea.vmem [#allocation5], %s251
        %p253 = scmp.lt.s32.totalorder %s24, 1
        %s254 = scalar_select %p253, %s24, 1
        %p255 = scmp.lt.s32.totalorder %s25, 0
        %s256 = scalar_select %p255, %s25, 0
        %s257 = sadd.s32 %s256, %s254
        %s258 = smul.addr %s257, 4
        %s259 = scalar_lea.vmem %s0, %s258
        %v260 = vld [vmem:[%s259] sm:$0xf]
        %v263 = vrot.slane 0.0, 4
        %v264 = vrot.slane %v260, 4
        %265 = vrot.lane.b32.xlu0 %v263, 127
        %v266 = vpop.permute.xlu0 %265
        %267 = vrot.lane.b32.xlu0 %v264, 127
        %v268 = vpop.permute.xlu0 %267
        %vm269 = vcmask 1039360
        %v270 = vsel %vm269, %v266, %v268
        %273 = vrot.lane.b32.xlu0 %v260, 126
        %v274 = vpop.permute.xlu0 %273
        %vm275 = vcmask 1043456
        %v276 = vsel %vm275, 0.0, %v270
        %v277 = vsel %vm275, %v260, %v268
        %v278 = vld [vmem:[%s1] sm:$0xff]
        %v279 = vld [vmem:[%s1 + $0x8] sm:$0xff]
        %v280 = vld [vmem:[%s2] sm:$0xff]
        %v281 = vld [vmem:[%s2 + $0x8] sm:$0xff]
        %283 = vset.pattern.permute.xlu0 0
        %284 = vperm.xlu0 %283, %v280
        %v285 = vpop.permute.xlu0 %284
        %288 = vset.pattern.permute.xlu0 0
        %289 = vperm.xlu0 %288, %v281
        %v290 = vpop.permute.xlu0 %289
        %294 = vrot.lane.b32.xlu0 %v276, 2
        %v295 = vpop.permute.xlu0 %294
        %296 = vrot.lane.b32.xlu0 %v277, 2
        %v297 = vpop.permute.xlu0 %296
        %298 = vrot.lane.b32.xlu0 %v274, 2
        %v299 = vpop.permute.xlu0 %298
        %vm300 = vcmask 15360
        %v301 = vsel %vm300, %v295, %v297
        %vm303 = vcmask 97280
        %v305 = vsel %vm303, %v278, 0
        %v308 = vsel %vm303, %v279, 0
        %v310 = vsel %vm275, %v299, 0
        %312 = vmatpush.msra.mxu0 0.0
        %313 = vmatpush.msra.mxu0 0.0
        %314 = vmatpush.msra.mxu0 0.0
        %315 = vmatpush.msra.mxu0 0.0
        %316 = vmatpush.msra.mxu0 0.0
        %317 = vmatpush.msra.mxu0 0.0
        %318 = vmatpush.msra.mxu0 0.0
        %319 = vmatpush.msra.mxu0 0.0
        %320 = vmatpush.msra.mxu0 0.0
        %321 = vmatpush.msra.mxu0 0.0
        %322 = vmatpush.msra.mxu0 0.0
        %323 = vmatpush.msra.mxu0 0.0
        %324 = vmatpush.msra.mxu0 0.0
        %325 = vmatpush.msra.mxu0 0.0
        %326 = vmatpush.msra.mxu0 %v310
        %327 = vmatpush.msra.mxu0 %v301
        %328 = vmatmul.f32.gmra.mxu0 %v305
        %v329 = vpop.f32.mrf.mxu0
        %v330 = vadd.f32 %v285, %v329
        %331 = vmatmul.f32.gmra.mxu0 %v308
        %v332 = vpop.f32.mrf.mxu0
        %v333 = vadd.f32 %v290, %v332
        %334 = vdwg.mxu0
        %v335 = vmax.f32 %v330, 0.0
        %337 = vrot.lane.b32.xlu0 0.0, 127
        %v338 = vpop.permute.xlu0 %337
        %339 = vrot.lane.b32.xlu0 %v335, 127
        %v340 = vpop.permute.xlu0 %339
        %v341 = vsel %vm269, %v338, %v340
        %342 = vrot.lane.b32.xlu0 %v335, 126
        %v343 = vpop.permute.xlu0 %342
        %v344 = vld [vmem:[#allocation2] sm:$0xff]
        %v345 = vld [vmem:[%s4] sm:$0xff]
        %347 = vset.pattern.permute.xlu0 0
        %348 = vperm.xlu0 %347, %v345
        %v349 = vpop.permute.xlu0 %348
        %351 = vrot.lane.b32.xlu0 0.0, 2
        %v352 = vpop.permute.xlu0 %351
        %353 = vrot.lane.b32.xlu0 %v335, 2
        %v354 = vpop.permute.xlu0 %353
        %355 = vrot.lane.b32.xlu0 %v341, 2
        %v356 = vpop.permute.xlu0 %355
        %357 = vrot.lane.b32.xlu0 %v340, 2
        %v358 = vpop.permute.xlu0 %357
        %359 = vrot.lane.b32.xlu0 %v343, 2
        %v360 = vpop.permute.xlu0 %359
        %v361 = vsel %vm300, %v352, %v354
        %v362 = vsel %vm300, %v356, %v358
        %vm366 = vcmask 195584
        %v368 = vsel %vm366, %v344, 0
        %370 = vmatpush.msra.mxu0 0.0
        %371 = vmatpush.msra.mxu0 0.0
        %372 = vmatpush.msra.mxu0 0.0
        %373 = vmatpush.msra.mxu0 0.0
        %374 = vmatpush.msra.mxu0 0.0
        %375 = vmatpush.msra.mxu0 0.0
        %376 = vmatpush.msra.mxu0 0.0
        %377 = vmatpush.msra.mxu0 0.0
        %378 = vmatpush.msra.mxu0 0.0
        %379 = vmatpush.msra.mxu0 0.0
        %380 = vmatpush.msra.mxu0 0.0
        %381 = vmatpush.msra.mxu0 0.0
        %382 = vmatpush.msra.mxu0 0.0
        %383 = vmatpush.msra.mxu0 %v360
        %384 = vmatpush.msra.mxu0 %v362
        %385 = vmatpush.msra.mxu0 %v361
        %386 = vmatmul.f32.gmra.mxu0 %v368
        %v387 = vpop.f32.mrf.mxu0
        %v388 = vadd.f32 %v349, %v387
        %389 = vdwg.mxu0
        %v390 = vmax.f32 %v388, 0.0
        %v391 = vadd.f32 %v390, %v333
        %v392 = vmax.f32 %v391, 0.0
        %vm393 = vcmask 130048
        %394 = vst.msk [vmem:[%s252] sm:$0xff] %vm393, %v392
        %s395 = sand.u32 %s154, 1
        %s396 = scalar_lea.sflag [#allocation4], %s395
        %s397 = sand.u32 %s154, 1
        %s398 = smul.addr %s397, 8
        %s399 = scalar_lea.vmem [#allocation5], %s398
        // Predicated region
        $region45: #{tpu_custom_call.1} parent=39 // pred_check
          %p400 = pneg %p164
        $region46: #{tpu_custom_call.1} parent=39 // pred_check_branch
          %402 = sbr.rel (%p400) target = $region48
        $region47: #{tpu_custom_call.1} parent=39 // pred_region
          %404 = vsyncadd %s396, 0
          %s405 = sadd.s32 %s25, %s24
          %s406 = smul.addr %s405, 8
          %s407 = scalar_lea.hbm %s5, %s406
          %s409 = sshll.u32 %s399, 4
          %s410 = int_to_ptr.vmem [resolvable:$true] %s409
          %s411 = sshll.u32 %s407, 4
          %s412 = int_to_ptr.hbm [resolvable:$true] %s411
          %414 = dma.vmem_to_hbm [thread:$0]  %s410, 128, %s412, %s396
        $region48: #{tpu_custom_call.1} parent=39 // pred_fallthru
          _
      $region40: #{tpu_custom_call.1} parent=5 // pred_fallthru
        _
      %p415 = scmp.le.s32.totalorder 2, %s15
      // Predicated region
      $region49: #{tpu_custom_call.1} parent=5 // pred_check
        %p416 = pneg %p415
      $region50: #{tpu_custom_call.1} parent=5 // pred_check_branch
        %418 = sbr.rel (%p416) target = $region52
      $region51: #{tpu_custom_call.1} parent=5 // pred_region
        %s419 = ssub.s32 %s15, 2
        // Predicated region
        $region53: #{tpu_custom_call.1} parent=51 // pred_check
          %p420 = pneg %p170
        $region54: #{tpu_custom_call.1} parent=51 // pred_check_branch
          %422 = sbr.rel (%p420) target = $region56
        $region55: #{tpu_custom_call.1} parent=51 // pred_region
          %s423 = sand.u32 %s155, 1
          %s424 = scalar_lea.sflag [#allocation4], %s423
          %s425 = sand.u32 %s155, 1
          %s426 = smul.addr %s425, 8
          %s427 = scalar_lea.vmem [#allocation5], %s426
          %429 = dma.done %s424, 128
        $region56: #{tpu_custom_call.1} parent=51 // pred_fallthru
          _
      $region52: #{tpu_custom_call.1} parent=5 // pred_fallthru
        _
    $region6: #{tpu_custom_call.1} parent=1 // loop_footer
      %s19 = sadd.s32 1, %s15
    $region7: #{tpu_custom_call.1} parent=1 // loop_footer_branch
      %14 = sbr.rel target = $region3
    $region8: #{tpu_custom_call.1} parent=1 // loop_exit
      _
    %430 = vsyncpa [#allocation3], 1
    %s431 = scalar_lea.sflag [#allocation3], 1
    %432 = vsyncpa %s431, 1
    %433 = vsyncpa [#allocation4], 1
    %s434 = scalar_lea.sflag [#allocation4], 1
    %435 = vsyncpa %s434, 1

</llo_original>
